<compile_context>
chip_gen: v7x
topology: tpu7x:2x2x1
jax: 0.10.0
libtpu: 0.0.40
codegen_flags: <defaults>
</compile_context>

<pallas_src>
import jax
import jax.numpy as jnp
from jax.experimental import pallas as pl
from jax.experimental.pallas import tpu as pltpu


def _dense_sigmoid_rows(rows, w_ref, b_ref, fan_in, fan_out):
    """Unrolled VPU FMA chain on lane-dense [1, TB] rows.

    rows:   python list of fan_in arrays, each [1, TB] float32
    w_ref:  SMEM ref [fan_out, fan_in]  (torch Linear layout)
    b_ref:  SMEM ref [fan_out]
    returns python list of fan_out arrays, each [1, TB] float32
    """
    out_rows = []
    for o in range(fan_out):
        acc = rows[0] * w_ref[o, 0]
        for i in range(1, fan_in):
            acc = acc + rows[i] * w_ref[o, i]
        # bias folded as a single scalar add, then EUP sigmoid
        out_rows.append(jax.nn.sigmoid(acc + b_ref[o]))
    return out_rows


def mlp_kernel(x_ref, w1_ref, b1_ref, w2_ref, b2_ref, w3_ref, b3_ref, o_ref):
    # x_ref : VMEM [8, TB]  (features on sublanes, batch on lanes)
    # w*/b* : SMEM, resident across grid steps
    # o_ref : VMEM [1, TB]  lane-dense output tile
    x = x_ref[...]                                   # [8, TB]
    h = [x[i:i + 1, :] for i in range(8)]            # eight [1, TB] rows
    h = _dense_sigmoid_rows(h, w1_ref, b1_ref, 8, 6)
    h = _dense_sigmoid_rows(h, w2_ref, b2_ref, 6, 4)
    h = _dense_sigmoid_rows(h, w3_ref, b3_ref, 4, 1)
    o_ref[...] = h[0]                                # [1, TB]


def _round_up(n, m):
    return ((n + m - 1) // m) * m


def mlp_forward(x, params, *, tile_b=1024):
    """x: [B, 8] float32 -> [B, 1] float32 (same semantics as the torch model).

    Note: for very small batches a plain jnp forward is faster than any kernel
    dispatch (per-call overhead >> ~150 FLOPs/row); we still always run the
    Pallas path here so the kernel itself is exercised.
    """
    B, F = x.shape
    assert F == 8
    w1, b1 = params["w1"], params["b1"]
    w2, b2 = params["w2"], params["b2"]
    w3, b3 = params["w3"], params["b3"]

    # Lane-dense layout: batch on the last (128-lane) axis, padded to the tile.
    xt = x.T                                          # [8, B]
    tb = _round_up(min(tile_b, _round_up(B, 128)), 128)
    b_pad = _round_up(B, tb)
    if b_pad != B:
        xt = jnp.pad(xt, ((0, 0), (0, b_pad - B)))

    smem = pl.BlockSpec(memory_space=pltpu.MemorySpace.SMEM)
    out = pl.pallas_call(
        mlp_kernel,
        out_shape=jax.ShapeDtypeStruct((1, b_pad), jnp.float32),
        grid=(b_pad // tb,),
        in_specs=[
            pl.BlockSpec((8, tb), lambda i: (0, i)),   # batch-tiled, pipelined
            smem, smem, smem, smem, smem, smem,        # params stay resident
        ],
        out_specs=pl.BlockSpec((1, tb), lambda i: (0, i)),
        compiler_params=pltpu.CompilerParams(
            dimension_semantics=("parallel",)),        # shards over v7x's 2 TCs
    )(xt, w1, b1, w2, b2, w3, b3)
    return out[0, :B].reshape(B, 1)


def init_params(key):
    """Deterministic init mirroring torch.nn.Linear: U(-1/sqrt(fan_in), +...).

    Weights are stored in torch layout [out, in]; biases as [out]."""
    dims = [(8, 6), (6, 4), (4, 1)]
    params = {}
    for i, (fan_in, fan_out) in enumerate(dims, start=1):
        key, kw, kb = jax.random.split(key, 3)
        bound = 1.0 / (fan_in ** 0.5)
        params[f"w{i}"] = jax.random.uniform(
            kw, (fan_out, fan_in), jnp.float32, -bound, bound
        )
        params[f"b{i}"] = jax.random.uniform(
            kb, (fan_out,), jnp.float32, -bound, bound
        )
    return params


def reference_forward(x, params):
    h = jax.nn.sigmoid(x @ params["w1"].T + params["b1"])
    h = jax.nn.sigmoid(h @ params["w2"].T + params["b2"])
    h = jax.nn.sigmoid(h @ params["w3"].T + params["b3"])
    return h


if __name__ == "__main__":
    key = jax.random.PRNGKey(0)
    kx, kp = jax.random.split(key)
    # B=300 with tile_b=128 exercises a 3-step grid plus tail padding/masking.
    B = 300
    x = jax.random.normal(kx, (B, 8), jnp.float32)
    params = init_params(kp)

    out = mlp_forward(x, params, tile_b=128)
    out = jax.block_until_ready(out)

    ref = reference_forward(x, params)
    assert out.shape == (B, 1)
    assert jnp.allclose(out, ref, atol=1e-5, rtol=1e-5)
    print("KERNEL_OK")
</pallas_src>

<mosaic_0001>
module attributes {stable_mosaic.version = 11 : i64} {
  func.func @mlp_kernel(%arg0: i32, %arg1: memref<8x128xf32, #tpu.memory_space<vmem>>, %arg2: memref<6x8xf32, #tpu.memory_space<smem>>, %arg3: memref<6xf32, #tpu.memory_space<smem>>, %arg4: memref<4x6xf32, #tpu.memory_space<smem>>, %arg5: memref<4xf32, #tpu.memory_space<smem>>, %arg6: memref<1x4xf32, #tpu.memory_space<smem>>, %arg7: memref<1xf32, #tpu.memory_space<smem>>, %arg8: memref<1x128xf32, #tpu.memory_space<vmem>>) attributes {dimension_semantics = [#tpu.dimension_semantics<parallel>], iteration_bounds = array<i64: 3>, scalar_prefetch = 0 : i64, scratch_operands = 0 : i64, tpu.core_type = #tpu.core_type<tc>, window_params = [{transform_indices = @transform_0, window_bounds = array<i64: 8, 128>}, {transform_indices = @transform_1, window_bounds = array<i64: 6, 8>}, {transform_indices = @transform_2, window_bounds = array<i64: 6>}, {transform_indices = @transform_3, window_bounds = array<i64: 4, 6>}, {transform_indices = @transform_4, window_bounds = array<i64: 4>}, {transform_indices = @transform_5, window_bounds = array<i64: 1, 4>}, {transform_indices = @transform_6, window_bounds = array<i64: 1>}, {transform_indices = @transform_7, window_bounds = array<i64: 1, 128>}]} {
    %c0 = arith.constant 0 : index
    %c0_0 = arith.constant 0 : index
    %0 = vector.load %arg1[%c0, %c0_0] : memref<8x128xf32, #tpu.memory_space<vmem>>, vector<8x128xf32>
    %1 = vector.extract_strided_slice %0 {offsets = [0, 0], sizes = [1, 128], strides = [1, 1]} : vector<8x128xf32> to vector<1x128xf32>
    %2 = vector.extract_strided_slice %0 {offsets = [1, 0], sizes = [1, 128], strides = [1, 1]} : vector<8x128xf32> to vector<1x128xf32>
    %3 = vector.extract_strided_slice %0 {offsets = [2, 0], sizes = [1, 128], strides = [1, 1]} : vector<8x128xf32> to vector<1x128xf32>
    %4 = vector.extract_strided_slice %0 {offsets = [3, 0], sizes = [1, 128], strides = [1, 1]} : vector<8x128xf32> to vector<1x128xf32>
    %5 = vector.extract_strided_slice %0 {offsets = [4, 0], sizes = [1, 128], strides = [1, 1]} : vector<8x128xf32> to vector<1x128xf32>
    %6 = vector.extract_strided_slice %0 {offsets = [5, 0], sizes = [1, 128], strides = [1, 1]} : vector<8x128xf32> to vector<1x128xf32>
    %7 = vector.extract_strided_slice %0 {offsets = [6, 0], sizes = [1, 128], strides = [1, 1]} : vector<8x128xf32> to vector<1x128xf32>
    %8 = vector.extract_strided_slice %0 {offsets = [7, 0], sizes = [1, 128], strides = [1, 1]} : vector<8x128xf32> to vector<1x128xf32>
    %c0_1 = arith.constant 0 : index
    %c0_2 = arith.constant 0 : index
    %9 = memref.load %arg2[%c0_1, %c0_2] : memref<6x8xf32, #tpu.memory_space<smem>>
    %10 = vector.broadcast %9 : f32 to vector<1x128xf32>
    %11 = arith.mulf %1, %10 : vector<1x128xf32>
    %c0_3 = arith.constant 0 : index
    %c1 = arith.constant 1 : index
    %12 = memref.load %arg2[%c0_3, %c1] : memref<6x8xf32, #tpu.memory_space<smem>>
    %13 = vector.broadcast %12 : f32 to vector<1x128xf32>
    %14 = arith.mulf %2, %13 : vector<1x128xf32>
    %15 = arith.addf %11, %14 : vector<1x128xf32>
    %c0_4 = arith.constant 0 : index
    %c2 = arith.constant 2 : index
    %16 = memref.load %arg2[%c0_4, %c2] : memref<6x8xf32, #tpu.memory_space<smem>>
    %17 = vector.broadcast %16 : f32 to vector<1x128xf32>
    %18 = arith.mulf %3, %17 : vector<1x128xf32>
    %19 = arith.addf %15, %18 : vector<1x128xf32>
    %c0_5 = arith.constant 0 : index
    %c3 = arith.constant 3 : index
    %20 = memref.load %arg2[%c0_5, %c3] : memref<6x8xf32, #tpu.memory_space<smem>>
    %21 = vector.broadcast %20 : f32 to vector<1x128xf32>
    %22 = arith.mulf %4, %21 : vector<1x128xf32>
    %23 = arith.addf %19, %22 : vector<1x128xf32>
    %c0_6 = arith.constant 0 : index
    %c4 = arith.constant 4 : index
    %24 = memref.load %arg2[%c0_6, %c4] : memref<6x8xf32, #tpu.memory_space<smem>>
    %25 = vector.broadcast %24 : f32 to vector<1x128xf32>
    %26 = arith.mulf %5, %25 : vector<1x128xf32>
    %27 = arith.addf %23, %26 : vector<1x128xf32>
    %c0_7 = arith.constant 0 : index
    %c5 = arith.constant 5 : index
    %28 = memref.load %arg2[%c0_7, %c5] : memref<6x8xf32, #tpu.memory_space<smem>>
    %29 = vector.broadcast %28 : f32 to vector<1x128xf32>
    %30 = arith.mulf %6, %29 : vector<1x128xf32>
    %31 = arith.addf %27, %30 : vector<1x128xf32>
    %c0_8 = arith.constant 0 : index
    %c6 = arith.constant 6 : index
    %32 = memref.load %arg2[%c0_8, %c6] : memref<6x8xf32, #tpu.memory_space<smem>>
    %33 = vector.broadcast %32 : f32 to vector<1x128xf32>
    %34 = arith.mulf %7, %33 : vector<1x128xf32>
    %35 = arith.addf %31, %34 : vector<1x128xf32>
    %c0_9 = arith.constant 0 : index
    %c7 = arith.constant 7 : index
    %36 = memref.load %arg2[%c0_9, %c7] : memref<6x8xf32, #tpu.memory_space<smem>>
    %37 = vector.broadcast %36 : f32 to vector<1x128xf32>
    %38 = arith.mulf %8, %37 : vector<1x128xf32>
    %39 = arith.addf %35, %38 : vector<1x128xf32>
    %c0_10 = arith.constant 0 : index
    %40 = memref.load %arg3[%c0_10] : memref<6xf32, #tpu.memory_space<smem>>
    %41 = vector.broadcast %40 : f32 to vector<1x128xf32>
    %42 = arith.addf %39, %41 : vector<1x128xf32>
    %43 = arith.negf %42 : vector<1x128xf32>
    %44 = math.exp %43 : vector<1x128xf32>
    %cst = arith.constant 1.000000e+00 : f32
    %45 = vector.broadcast %cst : f32 to vector<1x128xf32>
    %46 = arith.addf %45, %44 : vector<1x128xf32>
    %47 = arith.divf %45, %46 : vector<1x128xf32>
    %c1_11 = arith.constant 1 : index
    %c0_12 = arith.constant 0 : index
    %48 = memref.load %arg2[%c1_11, %c0_12] : memref<6x8xf32, #tpu.memory_space<smem>>
    %49 = vector.broadcast %48 : f32 to vector<1x128xf32>
    %50 = arith.mulf %1, %49 : vector<1x128xf32>
    %c1_13 = arith.constant 1 : index
    %c1_14 = arith.constant 1 : index
    %51 = memref.load %arg2[%c1_13, %c1_14] : memref<6x8xf32, #tpu.memory_space<smem>>
    %52 = vector.broadcast %51 : f32 to vector<1x128xf32>
    %53 = arith.mulf %2, %52 : vector<1x128xf32>
    %54 = arith.addf %50, %53 : vector<1x128xf32>
    %c1_15 = arith.constant 1 : index
    %c2_16 = arith.constant 2 : index
    %55 = memref.load %arg2[%c1_15, %c2_16] : memref<6x8xf32, #tpu.memory_space<smem>>
    %56 = vector.broadcast %55 : f32 to vector<1x128xf32>
    %57 = arith.mulf %3, %56 : vector<1x128xf32>
    %58 = arith.addf %54, %57 : vector<1x128xf32>
    %c1_17 = arith.constant 1 : index
    %c3_18 = arith.constant 3 : index
    %59 = memref.load %arg2[%c1_17, %c3_18] : memref<6x8xf32, #tpu.memory_space<smem>>
    %60 = vector.broadcast %59 : f32 to vector<1x128xf32>
    %61 = arith.mulf %4, %60 : vector<1x128xf32>
    %62 = arith.addf %58, %61 : vector<1x128xf32>
    %c1_19 = arith.constant 1 : index
    %c4_20 = arith.constant 4 : index
    %63 = memref.load %arg2[%c1_19, %c4_20] : memref<6x8xf32, #tpu.memory_space<smem>>
    %64 = vector.broadcast %63 : f32 to vector<1x128xf32>
    %65 = arith.mulf %5, %64 : vector<1x128xf32>
    %66 = arith.addf %62, %65 : vector<1x128xf32>
    %c1_21 = arith.constant 1 : index
    %c5_22 = arith.constant 5 : index
    %67 = memref.load %arg2[%c1_21, %c5_22] : memref<6x8xf32, #tpu.memory_space<smem>>
    %68 = vector.broadcast %67 : f32 to vector<1x128xf32>
    %69 = arith.mulf %6, %68 : vector<1x128xf32>
    %70 = arith.addf %66, %69 : vector<1x128xf32>
    %c1_23 = arith.constant 1 : index
    %c6_24 = arith.constant 6 : index
    %71 = memref.load %arg2[%c1_23, %c6_24] : memref<6x8xf32, #tpu.memory_space<smem>>
    %72 = vector.broadcast %71 : f32 to vector<1x128xf32>
    %73 = arith.mulf %7, %72 : vector<1x128xf32>
    %74 = arith.addf %70, %73 : vector<1x128xf32>
    %c1_25 = arith.constant 1 : index
    %c7_26 = arith.constant 7 : index
    %75 = memref.load %arg2[%c1_25, %c7_26] : memref<6x8xf32, #tpu.memory_space<smem>>
    %76 = vector.broadcast %75 : f32 to vector<1x128xf32>
    %77 = arith.mulf %8, %76 : vector<1x128xf32>
    %78 = arith.addf %74, %77 : vector<1x128xf32>
    %c1_27 = arith.constant 1 : index
    %79 = memref.load %arg3[%c1_27] : memref<6xf32, #tpu.memory_space<smem>>
    %80 = vector.broadcast %79 : f32 to vector<1x128xf32>
    %81 = arith.addf %78, %80 : vector<1x128xf32>
    %82 = arith.negf %81 : vector<1x128xf32>
    %83 = math.exp %82 : vector<1x128xf32>
    %cst_28 = arith.constant 1.000000e+00 : f32
    %84 = vector.broadcast %cst_28 : f32 to vector<1x128xf32>
    %85 = arith.addf %84, %83 : vector<1x128xf32>
    %86 = arith.divf %84, %85 : vector<1x128xf32>
    %c2_29 = arith.constant 2 : index
    %c0_30 = arith.constant 0 : index
    %87 = memref.load %arg2[%c2_29, %c0_30] : memref<6x8xf32, #tpu.memory_space<smem>>
    %88 = vector.broadcast %87 : f32 to vector<1x128xf32>
    %89 = arith.mulf %1, %88 : vector<1x128xf32>
    %c2_31 = arith.constant 2 : index
    %c1_32 = arith.constant 1 : index
    %90 = memref.load %arg2[%c2_31, %c1_32] : memref<6x8xf32, #tpu.memory_space<smem>>
    %91 = vector.broadcast %90 : f32 to vector<1x128xf32>
    %92 = arith.mulf %2, %91 : vector<1x128xf32>
    %93 = arith.addf %89, %92 : vector<1x128xf32>
    %c2_33 = arith.constant 2 : index
    %c2_34 = arith.constant 2 : index
    %94 = memref.load %arg2[%c2_33, %c2_34] : memref<6x8xf32, #tpu.memory_space<smem>>
    %95 = vector.broadcast %94 : f32 to vector<1x128xf32>
    %96 = arith.mulf %3, %95 : vector<1x128xf32>
    %97 = arith.addf %93, %96 : vector<1x128xf32>
    %c2_35 = arith.constant 2 : index
    %c3_36 = arith.constant 3 : index
    %98 = memref.load %arg2[%c2_35, %c3_36] : memref<6x8xf32, #tpu.memory_space<smem>>
    %99 = vector.broadcast %98 : f32 to vector<1x128xf32>
    %100 = arith.mulf %4, %99 : vector<1x128xf32>
    %101 = arith.addf %97, %100 : vector<1x128xf32>
    %c2_37 = arith.constant 2 : index
    %c4_38 = arith.constant 4 : index
    %102 = memref.load %arg2[%c2_37, %c4_38] : memref<6x8xf32, #tpu.memory_space<smem>>
    %103 = vector.broadcast %102 : f32 to vector<1x128xf32>
    %104 = arith.mulf %5, %103 : vector<1x128xf32>
    %105 = arith.addf %101, %104 : vector<1x128xf32>
    %c2_39 = arith.constant 2 : index
    %c5_40 = arith.constant 5 : index
    %106 = memref.load %arg2[%c2_39, %c5_40] : memref<6x8xf32, #tpu.memory_space<smem>>
    %107 = vector.broadcast %106 : f32 to vector<1x128xf32>
    %108 = arith.mulf %6, %107 : vector<1x128xf32>
    %109 = arith.addf %105, %108 : vector<1x128xf32>
    %c2_41 = arith.constant 2 : index
    %c6_42 = arith.constant 6 : index
    %110 = memref.load %arg2[%c2_41, %c6_42] : memref<6x8xf32, #tpu.memory_space<smem>>
    %111 = vector.broadcast %110 : f32 to vector<1x128xf32>
    %112 = arith.mulf %7, %111 : vector<1x128xf32>
    %113 = arith.addf %109, %112 : vector<1x128xf32>
    %c2_43 = arith.constant 2 : index
    %c7_44 = arith.constant 7 : index
    %114 = memref.load %arg2[%c2_43, %c7_44] : memref<6x8xf32, #tpu.memory_space<smem>>
    %115 = vector.broadcast %114 : f32 to vector<1x128xf32>
    %116 = arith.mulf %8, %115 : vector<1x128xf32>
    %117 = arith.addf %113, %116 : vector<1x128xf32>
    %c2_45 = arith.constant 2 : index
    %118 = memref.load %arg3[%c2_45] : memref<6xf32, #tpu.memory_space<smem>>
    %119 = vector.broadcast %118 : f32 to vector<1x128xf32>
    %120 = arith.addf %117, %119 : vector<1x128xf32>
    %121 = arith.negf %120 : vector<1x128xf32>
    %122 = math.exp %121 : vector<1x128xf32>
    %cst_46 = arith.constant 1.000000e+00 : f32
    %123 = vector.broadcast %cst_46 : f32 to vector<1x128xf32>
    %124 = arith.addf %123, %122 : vector<1x128xf32>
    %125 = arith.divf %123, %124 : vector<1x128xf32>
    %c3_47 = arith.constant 3 : index
    %c0_48 = arith.constant 0 : index
    %126 = memref.load %arg2[%c3_47, %c0_48] : memref<6x8xf32, #tpu.memory_space<smem>>
    %127 = vector.broadcast %126 : f32 to vector<1x128xf32>
    %128 = arith.mulf %1, %127 : vector<1x128xf32>
    %c3_49 = arith.constant 3 : index
    %c1_50 = arith.constant 1 : index
    %129 = memref.load %arg2[%c3_49, %c1_50] : memref<6x8xf32, #tpu.memory_space<smem>>
    %130 = vector.broadcast %129 : f32 to vector<1x128xf32>
    %131 = arith.mulf %2, %130 : vector<1x128xf32>
    %132 = arith.addf %128, %131 : vector<1x128xf32>
    %c3_51 = arith.constant 3 : index
    %c2_52 = arith.constant 2 : index
    %133 = memref.load %arg2[%c3_51, %c2_52] : memref<6x8xf32, #tpu.memory_space<smem>>
    %134 = vector.broadcast %133 : f32 to vector<1x128xf32>
    %135 = arith.mulf %3, %134 : vector<1x128xf32>
    %136 = arith.addf %132, %135 : vector<1x128xf32>
    %c3_53 = arith.constant 3 : index
    %c3_54 = arith.constant 3 : index
    %137 = memref.load %arg2[%c3_53, %c3_54] : memref<6x8xf32, #tpu.memory_space<smem>>
    %138 = vector.broadcast %137 : f32 to vector<1x128xf32>
    %139 = arith.mulf %4, %138 : vector<1x128xf32>
    %140 = arith.addf %136, %139 : vector<1x128xf32>
    %c3_55 = arith.constant 3 : index
    %c4_56 = arith.constant 4 : index
    %141 = memref.load %arg2[%c3_55, %c4_56] : memref<6x8xf32, #tpu.memory_space<smem>>
    %142 = vector.broadcast %141 : f32 to vector<1x128xf32>
    %143 = arith.mulf %5, %142 : vector<1x128xf32>
    %144 = arith.addf %140, %143 : vector<1x128xf32>
    %c3_57 = arith.constant 3 : index
    %c5_58 = arith.constant 5 : index
    %145 = memref.load %arg2[%c3_57, %c5_58] : memref<6x8xf32, #tpu.memory_space<smem>>
    %146 = vector.broadcast %145 : f32 to vector<1x128xf32>
    %147 = arith.mulf %6, %146 : vector<1x128xf32>
    %148 = arith.addf %144, %147 : vector<1x128xf32>
    %c3_59 = arith.constant 3 : index
    %c6_60 = arith.constant 6 : index
    %149 = memref.load %arg2[%c3_59, %c6_60] : memref<6x8xf32, #tpu.memory_space<smem>>
    %150 = vector.broadcast %149 : f32 to vector<1x128xf32>
    %151 = arith.mulf %7, %150 : vector<1x128xf32>
    %152 = arith.addf %148, %151 : vector<1x128xf32>
    %c3_61 = arith.constant 3 : index
    %c7_62 = arith.constant 7 : index
    %153 = memref.load %arg2[%c3_61, %c7_62] : memref<6x8xf32, #tpu.memory_space<smem>>
    %154 = vector.broadcast %153 : f32 to vector<1x128xf32>
    %155 = arith.mulf %8, %154 : vector<1x128xf32>
    %156 = arith.addf %152, %155 : vector<1x128xf32>
    %c3_63 = arith.constant 3 : index
    %157 = memref.load %arg3[%c3_63] : memref<6xf32, #tpu.memory_space<smem>>
    %158 = vector.broadcast %157 : f32 to vector<1x128xf32>
    %159 = arith.addf %156, %158 : vector<1x128xf32>
    %160 = arith.negf %159 : vector<1x128xf32>
    %161 = math.exp %160 : vector<1x128xf32>
    %cst_64 = arith.constant 1.000000e+00 : f32
    %162 = vector.broadcast %cst_64 : f32 to vector<1x128xf32>
    %163 = arith.addf %162, %161 : vector<1x128xf32>
    %164 = arith.divf %162, %163 : vector<1x128xf32>
    %c4_65 = arith.constant 4 : index
    %c0_66 = arith.constant 0 : index
    %165 = memref.load %arg2[%c4_65, %c0_66] : memref<6x8xf32, #tpu.memory_space<smem>>
    %166 = vector.broadcast %165 : f32 to vector<1x128xf32>
    %167 = arith.mulf %1, %166 : vector<1x128xf32>
    %c4_67 = arith.constant 4 : index
    %c1_68 = arith.constant 1 : index
    %168 = memref.load %arg2[%c4_67, %c1_68] : memref<6x8xf32, #tpu.memory_space<smem>>
    %169 = vector.broadcast %168 : f32 to vector<1x128xf32>
    %170 = arith.mulf %2, %169 : vector<1x128xf32>
    %171 = arith.addf %167, %170 : vector<1x128xf32>
    %c4_69 = arith.constant 4 : index
    %c2_70 = arith.constant 2 : index
    %172 = memref.load %arg2[%c4_69, %c2_70] : memref<6x8xf32, #tpu.memory_space<smem>>
    %173 = vector.broadcast %172 : f32 to vector<1x128xf32>
    %174 = arith.mulf %3, %173 : vector<1x128xf32>
    %175 = arith.addf %171, %174 : vector<1x128xf32>
    %c4_71 = arith.constant 4 : index
    %c3_72 = arith.constant 3 : index
    %176 = memref.load %arg2[%c4_71, %c3_72] : memref<6x8xf32, #tpu.memory_space<smem>>
    %177 = vector.broadcast %176 : f32 to vector<1x128xf32>
    %178 = arith.mulf %4, %177 : vector<1x128xf32>
    %179 = arith.addf %175, %178 : vector<1x128xf32>
    %c4_73 = arith.constant 4 : index
    %c4_74 = arith.constant 4 : index
    %180 = memref.load %arg2[%c4_73, %c4_74] : memref<6x8xf32, #tpu.memory_space<smem>>
    %181 = vector.broadcast %180 : f32 to vector<1x128xf32>
    %182 = arith.mulf %5, %181 : vector<1x128xf32>
    %183 = arith.addf %179, %182 : vector<1x128xf32>
    %c4_75 = arith.constant 4 : index
    %c5_76 = arith.constant 5 : index
    %184 = memref.load %arg2[%c4_75, %c5_76] : memref<6x8xf32, #tpu.memory_space<smem>>
    %185 = vector.broadcast %184 : f32 to vector<1x128xf32>
    %186 = arith.mulf %6, %185 : vector<1x128xf32>
    %187 = arith.addf %183, %186 : vector<1x128xf32>
    %c4_77 = arith.constant 4 : index
    %c6_78 = arith.constant 6 : index
    %188 = memref.load %arg2[%c4_77, %c6_78] : memref<6x8xf32, #tpu.memory_space<smem>>
    %189 = vector.broadcast %188 : f32 to vector<1x128xf32>
    %190 = arith.mulf %7, %189 : vector<1x128xf32>
    %191 = arith.addf %187, %190 : vector<1x128xf32>
    %c4_79 = arith.constant 4 : index
    %c7_80 = arith.constant 7 : index
    %192 = memref.load %arg2[%c4_79, %c7_80] : memref<6x8xf32, #tpu.memory_space<smem>>
    %193 = vector.broadcast %192 : f32 to vector<1x128xf32>
    %194 = arith.mulf %8, %193 : vector<1x128xf32>
    %195 = arith.addf %191, %194 : vector<1x128xf32>
    %c4_81 = arith.constant 4 : index
    %196 = memref.load %arg3[%c4_81] : memref<6xf32, #tpu.memory_space<smem>>
    %197 = vector.broadcast %196 : f32 to vector<1x128xf32>
    %198 = arith.addf %195, %197 : vector<1x128xf32>
    %199 = arith.negf %198 : vector<1x128xf32>
    %200 = math.exp %199 : vector<1x128xf32>
    %cst_82 = arith.constant 1.000000e+00 : f32
    %201 = vector.broadcast %cst_82 : f32 to vector<1x128xf32>
    %202 = arith.addf %201, %200 : vector<1x128xf32>
    %203 = arith.divf %201, %202 : vector<1x128xf32>
    %c5_83 = arith.constant 5 : index
    %c0_84 = arith.constant 0 : index
    %204 = memref.load %arg2[%c5_83, %c0_84] : memref<6x8xf32, #tpu.memory_space<smem>>
    %205 = vector.broadcast %204 : f32 to vector<1x128xf32>
    %206 = arith.mulf %1, %205 : vector<1x128xf32>
    %c5_85 = arith.constant 5 : index
    %c1_86 = arith.constant 1 : index
    %207 = memref.load %arg2[%c5_85, %c1_86] : memref<6x8xf32, #tpu.memory_space<smem>>
    %208 = vector.broadcast %207 : f32 to vector<1x128xf32>
    %209 = arith.mulf %2, %208 : vector<1x128xf32>
    %210 = arith.addf %206, %209 : vector<1x128xf32>
    %c5_87 = arith.constant 5 : index
    %c2_88 = arith.constant 2 : index
    %211 = memref.load %arg2[%c5_87, %c2_88] : memref<6x8xf32, #tpu.memory_space<smem>>
    %212 = vector.broadcast %211 : f32 to vector<1x128xf32>
    %213 = arith.mulf %3, %212 : vector<1x128xf32>
    %214 = arith.addf %210, %213 : vector<1x128xf32>
    %c5_89 = arith.constant 5 : index
    %c3_90 = arith.constant 3 : index
    %215 = memref.load %arg2[%c5_89, %c3_90] : memref<6x8xf32, #tpu.memory_space<smem>>
    %216 = vector.broadcast %215 : f32 to vector<1x128xf32>
    %217 = arith.mulf %4, %216 : vector<1x128xf32>
    %218 = arith.addf %214, %217 : vector<1x128xf32>
    %c5_91 = arith.constant 5 : index
    %c4_92 = arith.constant 4 : index
    %219 = memref.load %arg2[%c5_91, %c4_92] : memref<6x8xf32, #tpu.memory_space<smem>>
    %220 = vector.broadcast %219 : f32 to vector<1x128xf32>
    %221 = arith.mulf %5, %220 : vector<1x128xf32>
    %222 = arith.addf %218, %221 : vector<1x128xf32>
    %c5_93 = arith.constant 5 : index
    %c5_94 = arith.constant 5 : index
    %223 = memref.load %arg2[%c5_93, %c5_94] : memref<6x8xf32, #tpu.memory_space<smem>>
    %224 = vector.broadcast %223 : f32 to vector<1x128xf32>
    %225 = arith.mulf %6, %224 : vector<1x128xf32>
    %226 = arith.addf %222, %225 : vector<1x128xf32>
    %c5_95 = arith.constant 5 : index
    %c6_96 = arith.constant 6 : index
    %227 = memref.load %arg2[%c5_95, %c6_96] : memref<6x8xf32, #tpu.memory_space<smem>>
    %228 = vector.broadcast %227 : f32 to vector<1x128xf32>
    %229 = arith.mulf %7, %228 : vector<1x128xf32>
    %230 = arith.addf %226, %229 : vector<1x128xf32>
    %c5_97 = arith.constant 5 : index
    %c7_98 = arith.constant 7 : index
    %231 = memref.load %arg2[%c5_97, %c7_98] : memref<6x8xf32, #tpu.memory_space<smem>>
    %232 = vector.broadcast %231 : f32 to vector<1x128xf32>
    %233 = arith.mulf %8, %232 : vector<1x128xf32>
    %234 = arith.addf %230, %233 : vector<1x128xf32>
    %c5_99 = arith.constant 5 : index
    %235 = memref.load %arg3[%c5_99] : memref<6xf32, #tpu.memory_space<smem>>
    %236 = vector.broadcast %235 : f32 to vector<1x128xf32>
    %237 = arith.addf %234, %236 : vector<1x128xf32>
    %238 = arith.negf %237 : vector<1x128xf32>
    %239 = math.exp %238 : vector<1x128xf32>
    %cst_100 = arith.constant 1.000000e+00 : f32
    %240 = vector.broadcast %cst_100 : f32 to vector<1x128xf32>
    %241 = arith.addf %240, %239 : vector<1x128xf32>
    %242 = arith.divf %240, %241 : vector<1x128xf32>
    %c0_101 = arith.constant 0 : index
    %c0_102 = arith.constant 0 : index
    %243 = memref.load %arg4[%c0_101, %c0_102] : memref<4x6xf32, #tpu.memory_space<smem>>
    %244 = vector.broadcast %243 : f32 to vector<1x128xf32>
    %245 = arith.mulf %47, %244 : vector<1x128xf32>
    %c0_103 = arith.constant 0 : index
    %c1_104 = arith.constant 1 : index
    %246 = memref.load %arg4[%c0_103, %c1_104] : memref<4x6xf32, #tpu.memory_space<smem>>
    %247 = vector.broadcast %246 : f32 to vector<1x128xf32>
    %248 = arith.mulf %86, %247 : vector<1x128xf32>
    %249 = arith.addf %245, %248 : vector<1x128xf32>
    %c0_105 = arith.constant 0 : index
    %c2_106 = arith.constant 2 : index
    %250 = memref.load %arg4[%c0_105, %c2_106] : memref<4x6xf32, #tpu.memory_space<smem>>
    %251 = vector.broadcast %250 : f32 to vector<1x128xf32>
    %252 = arith.mulf %125, %251 : vector<1x128xf32>
    %253 = arith.addf %249, %252 : vector<1x128xf32>
    %c0_107 = arith.constant 0 : index
    %c3_108 = arith.constant 3 : index
    %254 = memref.load %arg4[%c0_107, %c3_108] : memref<4x6xf32, #tpu.memory_space<smem>>
    %255 = vector.broadcast %254 : f32 to vector<1x128xf32>
    %256 = arith.mulf %164, %255 : vector<1x128xf32>
    %257 = arith.addf %253, %256 : vector<1x128xf32>
    %c0_109 = arith.constant 0 : index
    %c4_110 = arith.constant 4 : index
    %258 = memref.load %arg4[%c0_109, %c4_110] : memref<4x6xf32, #tpu.memory_space<smem>>
    %259 = vector.broadcast %258 : f32 to vector<1x128xf32>
    %260 = arith.mulf %203, %259 : vector<1x128xf32>
    %261 = arith.addf %257, %260 : vector<1x128xf32>
    %c0_111 = arith.constant 0 : index
    %c5_112 = arith.constant 5 : index
    %262 = memref.load %arg4[%c0_111, %c5_112] : memref<4x6xf32, #tpu.memory_space<smem>>
    %263 = vector.broadcast %262 : f32 to vector<1x128xf32>
    %264 = arith.mulf %242, %263 : vector<1x128xf32>
    %265 = arith.addf %261, %264 : vector<1x128xf32>
    %c0_113 = arith.constant 0 : index
    %266 = memref.load %arg5[%c0_113] : memref<4xf32, #tpu.memory_space<smem>>
    %267 = vector.broadcast %266 : f32 to vector<1x128xf32>
    %268 = arith.addf %265, %267 : vector<1x128xf32>
    %269 = arith.negf %268 : vector<1x128xf32>
    %270 = math.exp %269 : vector<1x128xf32>
    %cst_114 = arith.constant 1.000000e+00 : f32
    %271 = vector.broadcast %cst_114 : f32 to vector<1x128xf32>
    %272 = arith.addf %271, %270 : vector<1x128xf32>
    %273 = arith.divf %271, %272 : vector<1x128xf32>
    %c1_115 = arith.constant 1 : index
    %c0_116 = arith.constant 0 : index
    %274 = memref.load %arg4[%c1_115, %c0_116] : memref<4x6xf32, #tpu.memory_space<smem>>
    %275 = vector.broadcast %274 : f32 to vector<1x128xf32>
    %276 = arith.mulf %47, %275 : vector<1x128xf32>
    %c1_117 = arith.constant 1 : index
    %c1_118 = arith.constant 1 : index
    %277 = memref.load %arg4[%c1_117, %c1_118] : memref<4x6xf32, #tpu.memory_space<smem>>
    %278 = vector.broadcast %277 : f32 to vector<1x128xf32>
    %279 = arith.mulf %86, %278 : vector<1x128xf32>
    %280 = arith.addf %276, %279 : vector<1x128xf32>
    %c1_119 = arith.constant 1 : index
    %c2_120 = arith.constant 2 : index
    %281 = memref.load %arg4[%c1_119, %c2_120] : memref<4x6xf32, #tpu.memory_space<smem>>
    %282 = vector.broadcast %281 : f32 to vector<1x128xf32>
    %283 = arith.mulf %125, %282 : vector<1x128xf32>
    %284 = arith.addf %280, %283 : vector<1x128xf32>
    %c1_121 = arith.constant 1 : index
    %c3_122 = arith.constant 3 : index
    %285 = memref.load %arg4[%c1_121, %c3_122] : memref<4x6xf32, #tpu.memory_space<smem>>
    %286 = vector.broadcast %285 : f32 to vector<1x128xf32>
    %287 = arith.mulf %164, %286 : vector<1x128xf32>
    %288 = arith.addf %284, %287 : vector<1x128xf32>
    %c1_123 = arith.constant 1 : index
    %c4_124 = arith.constant 4 : index
    %289 = memref.load %arg4[%c1_123, %c4_124] : memref<4x6xf32, #tpu.memory_space<smem>>
    %290 = vector.broadcast %289 : f32 to vector<1x128xf32>
    %291 = arith.mulf %203, %290 : vector<1x128xf32>
    %292 = arith.addf %288, %291 : vector<1x128xf32>
    %c1_125 = arith.constant 1 : index
    %c5_126 = arith.constant 5 : index
    %293 = memref.load %arg4[%c1_125, %c5_126] : memref<4x6xf32, #tpu.memory_space<smem>>
    %294 = vector.broadcast %293 : f32 to vector<1x128xf32>
    %295 = arith.mulf %242, %294 : vector<1x128xf32>
    %296 = arith.addf %292, %295 : vector<1x128xf32>
    %c1_127 = arith.constant 1 : index
    %297 = memref.load %arg5[%c1_127] : memref<4xf32, #tpu.memory_space<smem>>
    %298 = vector.broadcast %297 : f32 to vector<1x128xf32>
    %299 = arith.addf %296, %298 : vector<1x128xf32>
    %300 = arith.negf %299 : vector<1x128xf32>
    %301 = math.exp %300 : vector<1x128xf32>
    %cst_128 = arith.constant 1.000000e+00 : f32
    %302 = vector.broadcast %cst_128 : f32 to vector<1x128xf32>
    %303 = arith.addf %302, %301 : vector<1x128xf32>
    %304 = arith.divf %302, %303 : vector<1x128xf32>
    %c2_129 = arith.constant 2 : index
    %c0_130 = arith.constant 0 : index
    %305 = memref.load %arg4[%c2_129, %c0_130] : memref<4x6xf32, #tpu.memory_space<smem>>
    %306 = vector.broadcast %305 : f32 to vector<1x128xf32>
    %307 = arith.mulf %47, %306 : vector<1x128xf32>
    %c2_131 = arith.constant 2 : index
    %c1_132 = arith.constant 1 : index
    %308 = memref.load %arg4[%c2_131, %c1_132] : memref<4x6xf32, #tpu.memory_space<smem>>
    %309 = vector.broadcast %308 : f32 to vector<1x128xf32>
    %310 = arith.mulf %86, %309 : vector<1x128xf32>
    %311 = arith.addf %307, %310 : vector<1x128xf32>
    %c2_133 = arith.constant 2 : index
    %c2_134 = arith.constant 2 : index
    %312 = memref.load %arg4[%c2_133, %c2_134] : memref<4x6xf32, #tpu.memory_space<smem>>
    %313 = vector.broadcast %312 : f32 to vector<1x128xf32>
    %314 = arith.mulf %125, %313 : vector<1x128xf32>
    %315 = arith.addf %311, %314 : vector<1x128xf32>
    %c2_135 = arith.constant 2 : index
    %c3_136 = arith.constant 3 : index
    %316 = memref.load %arg4[%c2_135, %c3_136] : memref<4x6xf32, #tpu.memory_space<smem>>
    %317 = vector.broadcast %316 : f32 to vector<1x128xf32>
    %318 = arith.mulf %164, %317 : vector<1x128xf32>
    %319 = arith.addf %315, %318 : vector<1x128xf32>
    %c2_137 = arith.constant 2 : index
    %c4_138 = arith.constant 4 : index
    %320 = memref.load %arg4[%c2_137, %c4_138] : memref<4x6xf32, #tpu.memory_space<smem>>
    %321 = vector.broadcast %320 : f32 to vector<1x128xf32>
    %322 = arith.mulf %203, %321 : vector<1x128xf32>
    %323 = arith.addf %319, %322 : vector<1x128xf32>
    %c2_139 = arith.constant 2 : index
    %c5_140 = arith.constant 5 : index
    %324 = memref.load %arg4[%c2_139, %c5_140] : memref<4x6xf32, #tpu.memory_space<smem>>
    %325 = vector.broadcast %324 : f32 to vector<1x128xf32>
    %326 = arith.mulf %242, %325 : vector<1x128xf32>
    %327 = arith.addf %323, %326 : vector<1x128xf32>
    %c2_141 = arith.constant 2 : index
    %328 = memref.load %arg5[%c2_141] : memref<4xf32, #tpu.memory_space<smem>>
    %329 = vector.broadcast %328 : f32 to vector<1x128xf32>
    %330 = arith.addf %327, %329 : vector<1x128xf32>
    %331 = arith.negf %330 : vector<1x128xf32>
    %332 = math.exp %331 : vector<1x128xf32>
    %cst_142 = arith.constant 1.000000e+00 : f32
    %333 = vector.broadcast %cst_142 : f32 to vector<1x128xf32>
    %334 = arith.addf %333, %332 : vector<1x128xf32>
    %335 = arith.divf %333, %334 : vector<1x128xf32>
    %c3_143 = arith.constant 3 : index
    %c0_144 = arith.constant 0 : index
    %336 = memref.load %arg4[%c3_143, %c0_144] : memref<4x6xf32, #tpu.memory_space<smem>>
    %337 = vector.broadcast %336 : f32 to vector<1x128xf32>
    %338 = arith.mulf %47, %337 : vector<1x128xf32>
    %c3_145 = arith.constant 3 : index
    %c1_146 = arith.constant 1 : index
    %339 = memref.load %arg4[%c3_145, %c1_146] : memref<4x6xf32, #tpu.memory_space<smem>>
    %340 = vector.broadcast %339 : f32 to vector<1x128xf32>
    %341 = arith.mulf %86, %340 : vector<1x128xf32>
    %342 = arith.addf %338, %341 : vector<1x128xf32>
    %c3_147 = arith.constant 3 : index
    %c2_148 = arith.constant 2 : index
    %343 = memref.load %arg4[%c3_147, %c2_148] : memref<4x6xf32, #tpu.memory_space<smem>>
    %344 = vector.broadcast %343 : f32 to vector<1x128xf32>
    %345 = arith.mulf %125, %344 : vector<1x128xf32>
    %346 = arith.addf %342, %345 : vector<1x128xf32>
    %c3_149 = arith.constant 3 : index
    %c3_150 = arith.constant 3 : index
    %347 = memref.load %arg4[%c3_149, %c3_150] : memref<4x6xf32, #tpu.memory_space<smem>>
    %348 = vector.broadcast %347 : f32 to vector<1x128xf32>
    %349 = arith.mulf %164, %348 : vector<1x128xf32>
    %350 = arith.addf %346, %349 : vector<1x128xf32>
    %c3_151 = arith.constant 3 : index
    %c4_152 = arith.constant 4 : index
    %351 = memref.load %arg4[%c3_151, %c4_152] : memref<4x6xf32, #tpu.memory_space<smem>>
    %352 = vector.broadcast %351 : f32 to vector<1x128xf32>
    %353 = arith.mulf %203, %352 : vector<1x128xf32>
    %354 = arith.addf %350, %353 : vector<1x128xf32>
    %c3_153 = arith.constant 3 : index
    %c5_154 = arith.constant 5 : index
    %355 = memref.load %arg4[%c3_153, %c5_154] : memref<4x6xf32, #tpu.memory_space<smem>>
    %356 = vector.broadcast %355 : f32 to vector<1x128xf32>
    %357 = arith.mulf %242, %356 : vector<1x128xf32>
    %358 = arith.addf %354, %357 : vector<1x128xf32>
    %c3_155 = arith.constant 3 : index
    %359 = memref.load %arg5[%c3_155] : memref<4xf32, #tpu.memory_space<smem>>
    %360 = vector.broadcast %359 : f32 to vector<1x128xf32>
    %361 = arith.addf %358, %360 : vector<1x128xf32>
    %362 = arith.negf %361 : vector<1x128xf32>
    %363 = math.exp %362 : vector<1x128xf32>
    %cst_156 = arith.constant 1.000000e+00 : f32
    %364 = vector.broadcast %cst_156 : f32 to vector<1x128xf32>
    %365 = arith.addf %364, %363 : vector<1x128xf32>
    %366 = arith.divf %364, %365 : vector<1x128xf32>
    %c0_157 = arith.constant 0 : index
    %c0_158 = arith.constant 0 : index
    %367 = memref.load %arg6[%c0_157, %c0_158] : memref<1x4xf32, #tpu.memory_space<smem>>
    %368 = vector.broadcast %367 : f32 to vector<1x128xf32>
    %369 = arith.mulf %273, %368 : vector<1x128xf32>
    %c0_159 = arith.constant 0 : index
    %c1_160 = arith.constant 1 : index
    %370 = memref.load %arg6[%c0_159, %c1_160] : memref<1x4xf32, #tpu.memory_space<smem>>
    %371 = vector.broadcast %370 : f32 to vector<1x128xf32>
    %372 = arith.mulf %304, %371 : vector<1x128xf32>
    %373 = arith.addf %369, %372 : vector<1x128xf32>
    %c0_161 = arith.constant 0 : index
    %c2_162 = arith.constant 2 : index
    %374 = memref.load %arg6[%c0_161, %c2_162] : memref<1x4xf32, #tpu.memory_space<smem>>
    %375 = vector.broadcast %374 : f32 to vector<1x128xf32>
    %376 = arith.mulf %335, %375 : vector<1x128xf32>
    %377 = arith.addf %373, %376 : vector<1x128xf32>
    %c0_163 = arith.constant 0 : index
    %c3_164 = arith.constant 3 : index
    %378 = memref.load %arg6[%c0_163, %c3_164] : memref<1x4xf32, #tpu.memory_space<smem>>
    %379 = vector.broadcast %378 : f32 to vector<1x128xf32>
    %380 = arith.mulf %366, %379 : vector<1x128xf32>
    %381 = arith.addf %377, %380 : vector<1x128xf32>
    %c0_165 = arith.constant 0 : index
    %382 = memref.load %arg7[%c0_165] : memref<1xf32, #tpu.memory_space<smem>>
    %383 = vector.broadcast %382 : f32 to vector<1x128xf32>
    %384 = arith.addf %381, %383 : vector<1x128xf32>
    %385 = arith.negf %384 : vector<1x128xf32>
    %386 = math.exp %385 : vector<1x128xf32>
    %cst_166 = arith.constant 1.000000e+00 : f32
    %387 = vector.broadcast %cst_166 : f32 to vector<1x128xf32>
    %388 = arith.addf %387, %386 : vector<1x128xf32>
    %389 = arith.divf %387, %388 : vector<1x128xf32>
    %c0_167 = arith.constant 0 : index
    %c0_168 = arith.constant 0 : index
    %390 = vector.load %arg8[%c0_167, %c0_168] : memref<1x128xf32, #tpu.memory_space<vmem>>, vector<1x128xf32>
    tpu.vector_store %arg8[%c0_167, %c0_168], %389 {strides = array<i32>} : memref<1x128xf32, #tpu.memory_space<vmem>>, vector<1x128xf32>,
    return
  }
  func.func @transform_0(%arg0: i32) -> (i32, i32) {
    %c0_i32 = arith.constant 0 : i32
    %c0_i32_0 = arith.constant 0 : i32
    return %c0_i32, %arg0 : i32, i32
  }
  func.func @transform_1(%arg0: i32) -> (i32, i32) {
    %c0_i32 = arith.constant 0 : i32
    %c0_i32_0 = arith.constant 0 : i32
    %c0_i32_1 = arith.constant 0 : i32
    return %c0_i32, %c0_i32_0 : i32, i32
  }
  func.func @transform_2(%arg0: i32) -> i32 {
    %c0_i32 = arith.constant 0 : i32
    %c0_i32_0 = arith.constant 0 : i32
    return %c0_i32 : i32
  }
  func.func @transform_3(%arg0: i32) -> (i32, i32) {
    %c0_i32 = arith.constant 0 : i32
    %c0_i32_0 = arith.constant 0 : i32
    %c0_i32_1 = arith.constant 0 : i32
    return %c0_i32, %c0_i32_0 : i32, i32
  }
  func.func @transform_4(%arg0: i32) -> i32 {
    %c0_i32 = arith.constant 0 : i32
    %c0_i32_0 = arith.constant 0 : i32
    return %c0_i32 : i32
  }
  func.func @transform_5(%arg0: i32) -> (i32, i32) {
    %c0_i32 = arith.constant 0 : i32
    %c0_i32_0 = arith.constant 0 : i32
    %c0_i32_1 = arith.constant 0 : i32
    return %c0_i32, %c0_i32_0 : i32, i32
  }
  func.func @transform_6(%arg0: i32) -> i32 {
    %c0_i32 = arith.constant 0 : i32
    %c0_i32_0 = arith.constant 0 : i32
    return %c0_i32 : i32
  }
  func.func @transform_7(%arg0: i32) -> (i32, i32) {
    %c0_i32 = arith.constant 0 : i32
    %c0_i32_0 = arith.constant 0 : i32
    return %c0_i32, %arg0 : i32, i32
  }
}

</mosaic_0001>

<llo_original>
// kernel: tpu_custom_call.1
$region0: #{tpu_custom_call.1}
  #allocation0 [shape = 'u32[]', space=smem, size = 0x4, offset = 0x4, fixed_abs, tag = 'smem constant byte address 0x4 - core index']
  #allocation1 [shape = 'u32[144,128]{1,0:T(1,128)}', space=vmem, size = 0x12000, scoped, tag = 'internal scratch']
  #allocation2 [shape = 'f32[1]{0:T(128)S(6)}', space=smem, size = 0x200, scoped, tag = 'scoped memory for tpu_custom_call.1']
  %s0 = inlined_call_operand.hbm [shape: f32[8,384], index: 0, kind: input, shape index: {}]
  %s1 = inlined_call_operand.hbm [shape: f32[6,8], index: 1, kind: input, shape index: {}]
  %s2 = inlined_call_operand.vmem [shape: f32[6], index: 2, kind: input, shape index: {}]
  %s3 = inlined_call_operand.vmem [shape: f32[4,6], index: 3, kind: input, shape index: {}]
  %s4 = inlined_call_operand.vmem [shape: f32[4], index: 4, kind: input, shape index: {}]
  %s5 = inlined_call_operand.vmem [shape: f32[1,4], index: 5, kind: input, shape index: {}]
  %s6 = inlined_call_operand.<no memory space> [shape: f32[1], index: 6, kind: input, shape index: {}]
  %s7 = inlined_call_operand.hbm [shape: f32[1,384], index: 7, kind: output, shape index: {}]
  %s8 = sld [smem:[#allocation0]]
  $region85: #{tpu_custom_call.1} parent=0
    _
  %s10 = ssub.s32 1, %s8
  %s11 = scalar_select 0, %s10, %s8
  %12 = sst [smem:[#allocation2]] %s6
  $region1: #{tpu_custom_call.1} parent=0
    #allocation3 [shape = 'u8[8192]{0}', space=vmem, size = 0x2000, scoped, tag = 'input window, operand 0']
    #allocation4 [shape = 's32[2]{0}', space=sflag, size = 0x8, scoped, tag = 'scoped memory for tpu_custom_call.1']
    #allocation5 [shape = 's32[2]{0}', space=sflag, size = 0x8, scoped, tag = 'scoped memory for tpu_custom_call.1']
    #allocation6 [shape = 's32[2]{0}', space=sflag, size = 0x8, scoped, tag = 'scoped memory for tpu_custom_call.1']
    #allocation7 [shape = 's32[2]{0}', space=sflag, size = 0x8, scoped, tag = 'scoped memory for tpu_custom_call.1']
    #allocation8 [shape = 'u8[4096]{0}', space=smem, size = 0x1000, scoped, tag = 'input window, operand 1, single buffered']
    #allocation9 [shape = 'u8[512]{0}', space=smem, size = 0x200, scoped, tag = 'input window, operand 2, single buffered']
    #allocation10 [shape = 'u8[2048]{0}', space=smem, size = 0x800, scoped, tag = 'input window, operand 3, single buffered']
    #allocation11 [shape = 's32[1]{0}', space=sflag, size = 0x4, scoped, tag = 'scoped memory for tpu_custom_call.1']
    #allocation12 [shape = 'u8[512]{0}', space=smem, size = 0x200, scoped, tag = 'input window, operand 4, single buffered']
    #allocation13 [shape = 'u8[512]{0}', space=smem, size = 0x200, scoped, tag = 'input window, operand 5, single buffered']
    #allocation14 [shape = 's32[1]{0}', space=sflag, size = 0x4, scoped, tag = 'scoped memory for tpu_custom_call.1']
    #allocation15 [shape = 'u8[1024]{0}', space=vmem, size = 0x400, scoped, tag = 'output window, operand 0']
    %13 = vsyncpa [#allocation4], 0
    %s14 = scalar_lea.sflag [#allocation4], 1
    %15 = vsyncpa %s14, 0
    %16 = vsyncpa [#allocation6], 0
    %17 = vsyncpa [#allocation7], 0
    %18 = vsyncpa [#allocation11], 0
    %19 = vsyncpa [#allocation14], 0
    %20 = vsyncpa [#allocation5], 0
    %s21 = scalar_lea.sflag [#allocation5], 1
    %22 = vsyncpa %s21, 0
    loop: start=0, step=1, limit=5
    $region2: #{tpu_custom_call.1} parent=1 // loop_pre_header
      _
    $region3: #{tpu_custom_call.1} parent=1 // loop_header
      %s24 = sphi 0, %s28
      %p25 = scmp.ge.s32.totalorder %s24, 5
      %s34 = sphi 0, %s36
      %s37 = sphi 0, %s34
      %s38 = sphi 0, %s37
      %s54 = sphi 0, %s38
      %s58 = sphi 0, %s58
      %s60 = sphi 0, %s58
      %s61 = sphi 0, %s60
      %s75 = sphi 0, %s61
      %s79 = sphi 0, %s79
      %s81 = sphi 0, %s79
      %s82 = sphi 0, %s81
      %s96 = sphi 0, %s82
      %s100 = sphi 0, %s100
      %s102 = sphi 0, %s100
      %s103 = sphi 0, %s102
      %s117 = sphi 0, %s103
      %s121 = sphi 0, %s121
      %s123 = sphi 0, %s121
      %s124 = sphi 0, %s123
      %s138 = sphi 0, %s124
      %s142 = sphi 0, %s142
      %s144 = sphi 0, %s142
      %s145 = sphi 0, %s144
      %s159 = sphi 0, %s145
      %s163 = sphi 0, %s163
      %s165 = sphi 0, %s163
      %s166 = sphi 0, %s165
      %s180 = sphi 0, %s166
      %s186 = sphi 0, %s188
      %s189 = sphi 0, %s186
      %s190 = sphi 0, %s189
      %s206 = sphi 0, %s190
    $region4: #{tpu_custom_call.1} parent=1 // loop_header_branch
      %27 = sbr.rel (%p25) target = $region8
    $region5: #{tpu_custom_call.1} parent=1 // loop_body
      %s29 = ssub.s32 %s24, 1
      %s30 = ssub.s32 %s24, 2
      %s31 = sadd.s32 %s24, 1
      %s32 = ssub.s32 %s24, %s31
      %p33 = scmp.eq.s32.totalorder %s32, 0
      %s35 = sadd.s32 %s34, 1
      %s36 = scalar_select %p33, %s34, %s35
      %p39 = pneg %p33
      %p40 = scmp.eq.s32.totalorder %s24, 2
      %p41 = por %p39, %p40
      %p42 = scmp.ne.s32.totalorder %s34, %s37
      %p43 = scmp.eq.s32.totalorder %s24, 0
      %p44 = por %p42, %p43
      %p45 = scmp.ne.s32.totalorder %s34, %s37
      %p46 = scmp.eq.s32.totalorder %s29, 2
      %p47 = por %p45, %p46
      %p48 = scmp.ne.s32.totalorder %s37, %s38
      %p49 = scmp.eq.s32.totalorder %s29, 0
      %p50 = por %p48, %p49
      %p51 = scmp.ne.s32.totalorder %s37, %s38
      %p52 = scmp.eq.s32.totalorder %s30, 2
      %p53 = por %p51, %p52
      %p55 = scmp.ne.s32.totalorder %s38, %s54
      %p56 = scmp.eq.s32.totalorder %s30, 0
      %p57 = por %p55, %p56
      %s59 = sadd.s32 %s58, 1
      %p62 = scmp.eq.s32.totalorder %s24, 2
      %p63 = scmp.ne.s32.totalorder %s58, %s60
      %p64 = scmp.eq.s32.totalorder %s24, 0
      %p65 = por %p63, %p64
      %p66 = scmp.ne.s32.totalorder %s58, %s60
      %p67 = scmp.eq.s32.totalorder %s29, 2
      %p68 = por %p66, %p67
      %p69 = scmp.ne.s32.totalorder %s60, %s61
      %p70 = scmp.eq.s32.totalorder %s29, 0
      %p71 = por %p69, %p70
      %p72 = scmp.ne.s32.totalorder %s60, %s61
      %p73 = scmp.eq.s32.totalorder %s30, 2
      %p74 = por %p72, %p73
      %p76 = scmp.ne.s32.totalorder %s61, %s75
      %p77 = scmp.eq.s32.totalorder %s30, 0
      %p78 = por %p76, %p77
      %s80 = sadd.s32 %s79, 1
      %p83 = scmp.eq.s32.totalorder %s24, 2
      %p84 = scmp.ne.s32.totalorder %s79, %s81
      %p85 = scmp.eq.s32.totalorder %s24, 0
      %p86 = por %p84, %p85
      %p87 = scmp.ne.s32.totalorder %s79, %s81
      %p88 = scmp.eq.s32.totalorder %s29, 2
      %p89 = por %p87, %p88
      %p90 = scmp.ne.s32.totalorder %s81, %s82
      %p91 = scmp.eq.s32.totalorder %s29, 0
      %p92 = por %p90, %p91
      %p93 = scmp.ne.s32.totalorder %s81, %s82
      %p94 = scmp.eq.s32.totalorder %s30, 2
      %p95 = por %p93, %p94
      %p97 = scmp.ne.s32.totalorder %s82, %s96
      %p98 = scmp.eq.s32.totalorder %s30, 0
      %p99 = por %p97, %p98
      %s101 = sadd.s32 %s100, 1
      %p104 = scmp.eq.s32.totalorder %s24, 2
      %p105 = scmp.ne.s32.totalorder %s100, %s102
      %p106 = scmp.eq.s32.totalorder %s24, 0
      %p107 = por %p105, %p106
      %p108 = scmp.ne.s32.totalorder %s100, %s102
      %p109 = scmp.eq.s32.totalorder %s29, 2
      %p110 = por %p108, %p109
      %p111 = scmp.ne.s32.totalorder %s102, %s103
      %p112 = scmp.eq.s32.totalorder %s29, 0
      %p113 = por %p111, %p112
      %p114 = scmp.ne.s32.totalorder %s102, %s103
      %p115 = scmp.eq.s32.totalorder %s30, 2
      %p116 = por %p114, %p115
      %p118 = scmp.ne.s32.totalorder %s103, %s117
      %p119 = scmp.eq.s32.totalorder %s30, 0
      %p120 = por %p118, %p119
      %s122 = sadd.s32 %s121, 1
      %p125 = scmp.eq.s32.totalorder %s24, 2
      %p126 = scmp.ne.s32.totalorder %s121, %s123
      %p127 = scmp.eq.s32.totalorder %s24, 0
      %p128 = por %p126, %p127
      %p129 = scmp.ne.s32.totalorder %s121, %s123
      %p130 = scmp.eq.s32.totalorder %s29, 2
      %p131 = por %p129, %p130
      %p132 = scmp.ne.s32.totalorder %s123, %s124
      %p133 = scmp.eq.s32.totalorder %s29, 0
      %p134 = por %p132, %p133
      %p135 = scmp.ne.s32.totalorder %s123, %s124
      %p136 = scmp.eq.s32.totalorder %s30, 2
      %p137 = por %p135, %p136
      %p139 = scmp.ne.s32.totalorder %s124, %s138
      %p140 = scmp.eq.s32.totalorder %s30, 0
      %p141 = por %p139, %p140
      %s143 = sadd.s32 %s142, 1
      %p146 = scmp.eq.s32.totalorder %s24, 2
      %p147 = scmp.ne.s32.totalorder %s142, %s144
      %p148 = scmp.eq.s32.totalorder %s24, 0
      %p149 = por %p147, %p148
      %p150 = scmp.ne.s32.totalorder %s142, %s144
      %p151 = scmp.eq.s32.totalorder %s29, 2
      %p152 = por %p150, %p151
      %p153 = scmp.ne.s32.totalorder %s144, %s145
      %p154 = scmp.eq.s32.totalorder %s29, 0
      %p155 = por %p153, %p154
      %p156 = scmp.ne.s32.totalorder %s144, %s145
      %p157 = scmp.eq.s32.totalorder %s30, 2
      %p158 = por %p156, %p157
      %p160 = scmp.ne.s32.totalorder %s145, %s159
      %p161 = scmp.eq.s32.totalorder %s30, 0
      %p162 = por %p160, %p161
      %s164 = sadd.s32 %s163, 1
      %p167 = scmp.eq.s32.totalorder %s24, 2
      %p168 = scmp.ne.s32.totalorder %s163, %s165
      %p169 = scmp.eq.s32.totalorder %s24, 0
      %p170 = por %p168, %p169
      %p171 = scmp.ne.s32.totalorder %s163, %s165
      %p172 = scmp.eq.s32.totalorder %s29, 2
      %p173 = por %p171, %p172
      %p174 = scmp.ne.s32.totalorder %s165, %s166
      %p175 = scmp.eq.s32.totalorder %s29, 0
      %p176 = por %p174, %p175
      %p177 = scmp.ne.s32.totalorder %s165, %s166
      %p178 = scmp.eq.s32.totalorder %s30, 2
      %p179 = por %p177, %p178
      %p181 = scmp.ne.s32.totalorder %s166, %s180
      %p182 = scmp.eq.s32.totalorder %s30, 0
      %p183 = por %p181, %p182
      %s184 = ssub.s32 %s24, %s31
      %p185 = scmp.eq.s32.totalorder %s184, 0
      %s187 = sadd.s32 %s186, 1
      %s188 = scalar_select %p185, %s186, %s187
      %p191 = pneg %p185
      %p192 = scmp.eq.s32.totalorder %s24, 2
      %p193 = por %p191, %p192
      %p194 = scmp.ne.s32.totalorder %s186, %s189
      %p195 = scmp.eq.s32.totalorder %s24, 0
      %p196 = por %p194, %p195
      %p197 = scmp.ne.s32.totalorder %s186, %s189
      %p198 = scmp.eq.s32.totalorder %s29, 2
      %p199 = por %p197, %p198
      %p200 = scmp.ne.s32.totalorder %s189, %s190
      %p201 = scmp.eq.s32.totalorder %s29, 0
      %p202 = por %p200, %p201
      %p203 = scmp.ne.s32.totalorder %s189, %s190
      %p204 = scmp.eq.s32.totalorder %s30, 2
      %p205 = por %p203, %p204
      %p207 = scmp.ne.s32.totalorder %s190, %s206
      %p208 = scmp.eq.s32.totalorder %s30, 0
      %p209 = por %p207, %p208
      %p210 = scmp.le.s32.totalorder 1, %s24
      %p211 = scmp.lt.s32.totalorder %s24, 4
      %p212 = pnand %p210, %p211
      %p213 = pneg %p212
      // Predicated region
      $region9: #{tpu_custom_call.1} parent=5 // pred_check
        _
      $region10: #{tpu_custom_call.1} parent=5 // pred_check_branch
        %215 = sbr.rel (%p212) target = $region12
      $region11: #{tpu_custom_call.1} parent=5 // pred_region
        %s216 = ssub.s32 %s24, 1
        // Predicated region
        $region13: #{tpu_custom_call.1} parent=11 // pred_check
          %p217 = pneg %p71
        $region14: #{tpu_custom_call.1} parent=11 // pred_check_branch
          %219 = sbr.rel (%p217) target = $region16
        $region15: #{tpu_custom_call.1} parent=11 // pred_region
          %s221 = ssub.s32 128, 128
          %222 = vsyncadd [#allocation6], %s221
          %225 = dma.hbm_to_smem %s1, 128, [#allocation8], [#allocation6]
        $region16: #{tpu_custom_call.1} parent=11 // pred_fallthru
          _
        // Predicated region
        $region17: #{tpu_custom_call.1} parent=11 // pred_check
          %p226 = pneg %p92
        $region18: #{tpu_custom_call.1} parent=11 // pred_check_branch
          %228 = sbr.rel (%p226) target = $region20
        $region19: #{tpu_custom_call.1} parent=11 // pred_region
          %s230 = ssub.s32 16, 16
          %231 = vsyncadd [#allocation7], %s230
          %s233 = sshll.u32 %s2, 4
          %s234 = int_to_ptr.vmem [resolvable:$true] %s233
          %236 = dma.vmem_to_smem %s234, 16, [#allocation9], [#allocation7]
        $region20: #{tpu_custom_call.1} parent=11 // pred_fallthru
          _
        // Predicated region
        $region21: #{tpu_custom_call.1} parent=11 // pred_check
          %p237 = pneg %p113
        $region22: #{tpu_custom_call.1} parent=11 // pred_check_branch
          %239 = sbr.rel (%p237) target = $region24
        $region23: #{tpu_custom_call.1} parent=11 // pred_region
          %s241 = ssub.s32 64, 64
          %242 = vsyncadd [#allocation11], %s241
          %s244 = sshll.u32 %s3, 4
          %s245 = int_to_ptr.vmem [resolvable:$true] %s244
          %247 = dma.vmem_to_smem %s245, 64, [#allocation10], [#allocation11]
        $region24: #{tpu_custom_call.1} parent=11 // pred_fallthru
          _
        // Predicated region
        $region25: #{tpu_custom_call.1} parent=11 // pred_check
          %p248 = pneg %p134
        $region26: #{tpu_custom_call.1} parent=11 // pred_check_branch
          %250 = sbr.rel (%p248) target = $region28
        $region27: #{tpu_custom_call.1} parent=11 // pred_region
          %s252 = ssub.s32 16, 16
          %253 = vsyncadd [#allocation11], %s252
          %s255 = sshll.u32 %s4, 4
          %s256 = int_to_ptr.vmem [resolvable:$true] %s255
          %258 = dma.vmem_to_smem %s256, 16, [#allocation12], [#allocation11]
        $region28: #{tpu_custom_call.1} parent=11 // pred_fallthru
          _
        // Predicated region
        $region29: #{tpu_custom_call.1} parent=11 // pred_check
          %p259 = pneg %p155
        $region30: #{tpu_custom_call.1} parent=11 // pred_check_branch
          %261 = sbr.rel (%p259) target = $region32
        $region31: #{tpu_custom_call.1} parent=11 // pred_region
          %s263 = ssub.s32 16, 16
          %264 = vsyncadd [#allocation14], %s263
          %s266 = sshll.u32 %s5, 4
          %s267 = int_to_ptr.vmem [resolvable:$true] %s266
          %269 = dma.vmem_to_smem %s267, 16, [#allocation13], [#allocation14]
        $region32: #{tpu_custom_call.1} parent=11 // pred_fallthru
          _
        // Predicated region
        $region33: #{tpu_custom_call.1} parent=11 // pred_check
          %p270 = pneg %p176
        $region34: #{tpu_custom_call.1} parent=11 // pred_check_branch
          %272 = sbr.rel (%p270) target = $region36
        $region35: #{tpu_custom_call.1} parent=11 // pred_region
          _
        $region36: #{tpu_custom_call.1} parent=11 // pred_fallthru
          _
      $region12: #{tpu_custom_call.1} parent=5 // pred_fallthru
        _
      %p273 = scmp.lt.s32.totalorder %s24, 3
      // Predicated region
      $region37: #{tpu_custom_call.1} parent=5 // pred_check
        %p274 = pneg %p273
      $region38: #{tpu_custom_call.1} parent=5 // pred_check_branch
        %276 = sbr.rel (%p274) target = $region40
      $region39: #{tpu_custom_call.1} parent=5 // pred_region
        // Predicated region
        $region41: #{tpu_custom_call.1} parent=39 // pred_check
          %p277 = pneg %p44
        $region42: #{tpu_custom_call.1} parent=39 // pred_check_branch
          %279 = sbr.rel (%p277) target = $region44
        $region43: #{tpu_custom_call.1} parent=39 // pred_region
          %s280 = sand.u32 %s34, 1
          %s281 = scalar_lea.sflag [#allocation4], %s280
          %s282 = sand.u32 %s34, 1
          %s283 = smul.addr %s282, 8
          %s284 = scalar_lea.vmem [#allocation3], %s283
          %s286 = ssub.s32 128, 128
          %287 = vsyncadd %s281, %s286
          %s288 = smul.addr %s24, 128
          %s289 = scalar_lea.hbm %s0, %s288
          %s291 = sshll.u32 %s284, 4
          %s292 = int_to_ptr.vmem [resolvable:$true] %s291
          %294 = dma.hbm_to_vmem [thread:$0]  %s289, 128, %s292, %s281
        $region44: #{tpu_custom_call.1} parent=39 // pred_fallthru
          _
      $region40: #{tpu_custom_call.1} parent=5 // pred_fallthru
        _
      %p295 = scmp.le.s32.totalorder 1, %s24
      %p296 = scmp.lt.s32.totalorder %s24, 4
      %p297 = pnand %p295, %p296
      %p298 = pneg %p297
      // Predicated region
      $region45: #{tpu_custom_call.1} parent=5 // pred_check
        _
      $region46: #{tpu_custom_call.1} parent=5 // pred_check_branch
        %300 = sbr.rel (%p297) target = $region48
      $region47: #{tpu_custom_call.1} parent=5 // pred_region
        %s301 = ssub.s32 %s24, 1
        %s302 = sand.u32 %s37, 1
        %s303 = scalar_lea.sflag [#allocation4], %s302
        %s304 = sand.u32 %s37, 1
        %s305 = smul.addr %s304, 8
        %s306 = scalar_lea.vmem [#allocation3], %s305
        // Predicated region
        $region49: #{tpu_custom_call.1} parent=47 // pred_check
          %p307 = pneg %p50
        $region50: #{tpu_custom_call.1} parent=47 // pred_check_branch
          %309 = sbr.rel (%p307) target = $region52
        $region51: #{tpu_custom_call.1} parent=47 // pred_region
          %310 = dma.done %s303, 128
        $region52: #{tpu_custom_call.1} parent=47 // pred_fallthru
          _
        // Predicated region
        $region53: #{tpu_custom_call.1} parent=47 // pred_check
          %p311 = pneg %p71
        $region54: #{tpu_custom_call.1} parent=47 // pred_check_branch
          %313 = sbr.rel (%p311) target = $region56
        $region55: #{tpu_custom_call.1} parent=47 // pred_region
          %314 = dma.done [#allocation6], 128
        $region56: #{tpu_custom_call.1} parent=47 // pred_fallthru
          _
        // Predicated region
        $region57: #{tpu_custom_call.1} parent=47 // pred_check
          %p315 = pneg %p92
        $region58: #{tpu_custom_call.1} parent=47 // pred_check_branch
          %317 = sbr.rel (%p315) target = $region60
        $region59: #{tpu_custom_call.1} parent=47 // pred_region
          %318 = dma.done [#allocation7], 16
        $region60: #{tpu_custom_call.1} parent=47 // pred_fallthru
          _
        // Predicated region
        $region61: #{tpu_custom_call.1} parent=47 // pred_check
          %p319 = pneg %p113
        $region62: #{tpu_custom_call.1} parent=47 // pred_check_branch
          %321 = sbr.rel (%p319) target = $region64
        $region63: #{tpu_custom_call.1} parent=47 // pred_region
          %322 = dma.done [#allocation11], 64
        $region64: #{tpu_custom_call.1} parent=47 // pred_fallthru
          _
        // Predicated region
        $region65: #{tpu_custom_call.1} parent=47 // pred_check
          %p323 = pneg %p134
        $region66: #{tpu_custom_call.1} parent=47 // pred_check_branch
          %325 = sbr.rel (%p323) target = $region68
        $region67: #{tpu_custom_call.1} parent=47 // pred_region
          %326 = dma.done [#allocation11], 16
        $region68: #{tpu_custom_call.1} parent=47 // pred_fallthru
          _
        // Predicated region
        $region69: #{tpu_custom_call.1} parent=47 // pred_check
          %p327 = pneg %p155
        $region70: #{tpu_custom_call.1} parent=47 // pred_check_branch
          %329 = sbr.rel (%p327) target = $region72
        $region71: #{tpu_custom_call.1} parent=47 // pred_region
          %330 = dma.done [#allocation14], 16
        $region72: #{tpu_custom_call.1} parent=47 // pred_fallthru
          _
        %331 = sfence
        %s332 = sand.u32 %s37, 1
        %s333 = scalar_lea.sflag [#allocation4], %s332
        %s334 = sand.u32 %s37, 1
        %s335 = smul.addr %s334, 8
        %s336 = scalar_lea.vmem [#allocation3], %s335
        %p337 = pneg %p50
        %p338 = pneg %p47
        %p339 = pneg %p71
        %p340 = pneg %p68
        %p341 = pneg %p92
        %p342 = pneg %p89
        %p343 = pneg %p113
        %p344 = pneg %p110
        %p345 = pneg %p134
        %p346 = pneg %p131
        %p347 = pneg %p155
        %p348 = pneg %p152
        %p349 = pneg %p176
        %p350 = pneg %p173
        %p351 = pneg %p202
        %p352 = pneg %p199
        %s353 = sand.u32 %s189, 1
        %s354 = scalar_lea.sflag [#allocation5], %s353
        %s355 = sand.u32 %s189, 1
        %s356 = scalar_lea.vmem [#allocation15], %s355
        %v357 = vld [vmem:[%s306] sm:$0xff]
        %s358 = sld [smem:[#allocation8]]
        %v359 = vstv %s358
        %v360 = vmul.f32 %v357, %v359
        %s361 = sld [smem:[#allocation8 + $0x1]]
        %v362 = vstv %s361
        %v363 = vmul.f32 %v357, %v362
        %v365 = vrot.slane %v363, 1
        %v367 = vadd.f32 %v360, %v365
        %s368 = sld [smem:[#allocation8 + $0x2]]
        %v369 = vstv %s368
        %v370 = vmul.f32 %v357, %v369
        %v372 = vrot.slane %v370, 2
        %v374 = vadd.f32 %v367, %v372
        %s375 = sld [smem:[#allocation8 + $0x3]]
        %v376 = vstv %s375
        %v377 = vmul.f32 %v357, %v376
        %v379 = vrot.slane %v377, 3
        %v381 = vadd.f32 %v374, %v379
        %s382 = sld [smem:[#allocation8 + $0x4]]
        %v383 = vstv %s382
        %v384 = vmul.f32 %v357, %v383
        %v386 = vrot.slane %v384, 4
        %v388 = vadd.f32 %v381, %v386
        %s389 = sld [smem:[#allocation8 + $0x5]]
        %v390 = vstv %s389
        %v391 = vmul.f32 %v357, %v390
        %v393 = vrot.slane %v391, 5
        %v395 = vadd.f32 %v388, %v393
        %s396 = sld [smem:[#allocation8 + $0x6]]
        %v397 = vstv %s396
        %v398 = vmul.f32 %v357, %v397
        %v400 = vrot.slane %v398, 6
        %v402 = vadd.f32 %v395, %v400
        %s403 = sld [smem:[#allocation8 + $0x7]]
        %v404 = vstv %s403
        %v405 = vmul.f32 %v357, %v404
        %v407 = vrot.slane %v405, 7
        %v409 = vadd.f32 %v402, %v407
        %s410 = sld [smem:[#allocation9]]
        %v411 = vstv %s410
        %v412 = vadd.f32 %v409, %v411
        %v413 = vxor.u32 %v412, 2147483648
        %v414 = vmul.f32 %v413, 1.442695
        %v415 = vpow.pop %v414
        %v416 = vadd.f32 %v415, 1.0
        %v417 = vrcp.pop %v416
        %v418 = vmul.f32 1.0, %v417
        %s419 = sld [smem:[#allocation8 + $0x80]]
        %v420 = vstv %s419
        %v421 = vmul.f32 %v357, %v420
        %s422 = sld [smem:[#allocation8 + $0x81]]
        %v423 = vstv %s422
        %v424 = vmul.f32 %v357, %v423
        %v426 = vrot.slane %v424, 1
        %v428 = vadd.f32 %v421, %v426
        %s429 = sld [smem:[#allocation8 + $0x82]]
        %v430 = vstv %s429
        %v431 = vmul.f32 %v357, %v430
        %v433 = vrot.slane %v431, 2
        %v435 = vadd.f32 %v428, %v433
        %s436 = sld [smem:[#allocation8 + $0x83]]
        %v437 = vstv %s436
        %v438 = vmul.f32 %v357, %v437
        %v440 = vrot.slane %v438, 3
        %v442 = vadd.f32 %v435, %v440
        %s443 = sld [smem:[#allocation8 + $0x84]]
        %v444 = vstv %s443
        %v445 = vmul.f32 %v357, %v444
        %v447 = vrot.slane %v445, 4
        %v449 = vadd.f32 %v442, %v447
        %s450 = sld [smem:[#allocation8 + $0x85]]
        %v451 = vstv %s450
        %v452 = vmul.f32 %v357, %v451
        %v454 = vrot.slane %v452, 5
        %v456 = vadd.f32 %v449, %v454
        %s457 = sld [smem:[#allocation8 + $0x86]]
        %v458 = vstv %s457
        %v459 = vmul.f32 %v357, %v458
        %v461 = vrot.slane %v459, 6
        %v463 = vadd.f32 %v456, %v461
        %s464 = sld [smem:[#allocation8 + $0x87]]
        %v465 = vstv %s464
        %v466 = vmul.f32 %v357, %v465
        %v468 = vrot.slane %v466, 7
        %v470 = vadd.f32 %v463, %v468
        %s471 = sld [smem:[#allocation9 + $0x1]]
        %v472 = vstv %s471
        %v473 = vadd.f32 %v470, %v472
        %v474 = vxor.u32 %v473, 2147483648
        %v475 = vmul.f32 %v474, 1.442695
        %v476 = vpow.pop %v475
        %v477 = vadd.f32 %v476, 1.0
        %v478 = vrcp.pop %v477
        %v479 = vmul.f32 1.0, %v478
        %s480 = sld [smem:[#allocation8 + $0x100]]
        %v481 = vstv %s480
        %v482 = vmul.f32 %v357, %v481
        %s483 = sld [smem:[#allocation8 + $0x101]]
        %v484 = vstv %s483
        %v485 = vmul.f32 %v357, %v484
        %v487 = vrot.slane %v485, 1
        %v489 = vadd.f32 %v482, %v487
        %s490 = sld [smem:[#allocation8 + $0x102]]
        %v491 = vstv %s490
        %v492 = vmul.f32 %v357, %v491
        %v494 = vrot.slane %v492, 2
        %v496 = vadd.f32 %v489, %v494
        %s497 = sld [smem:[#allocation8 + $0x103]]
        %v498 = vstv %s497
        %v499 = vmul.f32 %v357, %v498
        %v501 = vrot.slane %v499, 3
        %v503 = vadd.f32 %v496, %v501
        %s504 = sld [smem:[#allocation8 + $0x104]]
        %v505 = vstv %s504
        %v506 = vmul.f32 %v357, %v505
        %v508 = vrot.slane %v506, 4
        %v510 = vadd.f32 %v503, %v508
        %s511 = sld [smem:[#allocation8 + $0x105]]
        %v512 = vstv %s511
        %v513 = vmul.f32 %v357, %v512
        %v515 = vrot.slane %v513, 5
        %v517 = vadd.f32 %v510, %v515
        %s518 = sld [smem:[#allocation8 + $0x106]]
        %v519 = vstv %s518
        %v520 = vmul.f32 %v357, %v519
        %v522 = vrot.slane %v520, 6
        %v524 = vadd.f32 %v517, %v522
        %s525 = sld [smem:[#allocation8 + $0x107]]
        %v526 = vstv %s525
        %v527 = vmul.f32 %v357, %v526
        %v529 = vrot.slane %v527, 7
        %v531 = vadd.f32 %v524, %v529
        %s532 = sld [smem:[#allocation9 + $0x2]]
        %v533 = vstv %s532
        %v534 = vadd.f32 %v531, %v533
        %v535 = vxor.u32 %v534, 2147483648
        %v536 = vmul.f32 %v535, 1.442695
        %v537 = vpow.pop %v536
        %v538 = vadd.f32 %v537, 1.0
        %v539 = vrcp.pop %v538
        %v540 = vmul.f32 1.0, %v539
        %s541 = sld [smem:[#allocation8 + $0x180]]
        %v542 = vstv %s541
        %v543 = vmul.f32 %v357, %v542
        %s544 = sld [smem:[#allocation8 + $0x181]]
        %v545 = vstv %s544
        %v546 = vmul.f32 %v357, %v545
        %v548 = vrot.slane %v546, 1
        %v550 = vadd.f32 %v543, %v548
        %s551 = sld [smem:[#allocation8 + $0x182]]
        %v552 = vstv %s551
        %v553 = vmul.f32 %v357, %v552
        %v555 = vrot.slane %v553, 2
        %v557 = vadd.f32 %v550, %v555
        %s558 = sld [smem:[#allocation8 + $0x183]]
        %v559 = vstv %s558
        %v560 = vmul.f32 %v357, %v559
        %v562 = vrot.slane %v560, 3
        %v564 = vadd.f32 %v557, %v562
        %s565 = sld [smem:[#allocation8 + $0x184]]
        %v566 = vstv %s565
        %v567 = vmul.f32 %v357, %v566
        %v569 = vrot.slane %v567, 4
        %v571 = vadd.f32 %v564, %v569
        %s572 = sld [smem:[#allocation8 + $0x185]]
        %v573 = vstv %s572
        %v574 = vmul.f32 %v357, %v573
        %v576 = vrot.slane %v574, 5
        %v578 = vadd.f32 %v571, %v576
        %s579 = sld [smem:[#allocation8 + $0x186]]
        %v580 = vstv %s579
        %v581 = vmul.f32 %v357, %v580
        %v583 = vrot.slane %v581, 6
        %v585 = vadd.f32 %v578, %v583
        %s586 = sld [smem:[#allocation8 + $0x187]]
        %v587 = vstv %s586
        %v588 = vmul.f32 %v357, %v587
        %v590 = vrot.slane %v588, 7
        %v592 = vadd.f32 %v585, %v590
        %s593 = sld [smem:[#allocation9 + $0x3]]
        %v594 = vstv %s593
        %v595 = vadd.f32 %v592, %v594
        %v596 = vxor.u32 %v595, 2147483648
        %v597 = vmul.f32 %v596, 1.442695
        %v598 = vpow.pop %v597
        %v599 = vadd.f32 %v598, 1.0
        %v600 = vrcp.pop %v599
        %v601 = vmul.f32 1.0, %v600
        %s602 = sld [smem:[#allocation8 + $0x200]]
        %v603 = vstv %s602
        %v604 = vmul.f32 %v357, %v603
        %s605 = sld [smem:[#allocation8 + $0x201]]
        %v606 = vstv %s605
        %v607 = vmul.f32 %v357, %v606
        %v609 = vrot.slane %v607, 1
        %v611 = vadd.f32 %v604, %v609
        %s612 = sld [smem:[#allocation8 + $0x202]]
        %v613 = vstv %s612
        %v614 = vmul.f32 %v357, %v613
        %v616 = vrot.slane %v614, 2
        %v618 = vadd.f32 %v611, %v616
        %s619 = sld [smem:[#allocation8 + $0x203]]
        %v620 = vstv %s619
        %v621 = vmul.f32 %v357, %v620
        %v623 = vrot.slane %v621, 3
        %v625 = vadd.f32 %v618, %v623
        %s626 = sld [smem:[#allocation8 + $0x204]]
        %v627 = vstv %s626
        %v628 = vmul.f32 %v357, %v627
        %v630 = vrot.slane %v628, 4
        %v632 = vadd.f32 %v625, %v630
        %s633 = sld [smem:[#allocation8 + $0x205]]
        %v634 = vstv %s633
        %v635 = vmul.f32 %v357, %v634
        %v637 = vrot.slane %v635, 5
        %v639 = vadd.f32 %v632, %v637
        %s640 = sld [smem:[#allocation8 + $0x206]]
        %v641 = vstv %s640
        %v642 = vmul.f32 %v357, %v641
        %v644 = vrot.slane %v642, 6
        %v646 = vadd.f32 %v639, %v644
        %s647 = sld [smem:[#allocation8 + $0x207]]
        %v648 = vstv %s647
        %v649 = vmul.f32 %v357, %v648
        %v651 = vrot.slane %v649, 7
        %v653 = vadd.f32 %v646, %v651
        %s654 = sld [smem:[#allocation9 + $0x4]]
        %v655 = vstv %s654
        %v656 = vadd.f32 %v653, %v655
        %v657 = vxor.u32 %v656, 2147483648
        %v658 = vmul.f32 %v657, 1.442695
        %v659 = vpow.pop %v658
        %v660 = vadd.f32 %v659, 1.0
        %v661 = vrcp.pop %v660
        %v662 = vmul.f32 1.0, %v661
        %s663 = sld [smem:[#allocation8 + $0x280]]
        %v664 = vstv %s663
        %v665 = vmul.f32 %v357, %v664
        %s666 = sld [smem:[#allocation8 + $0x281]]
        %v667 = vstv %s666
        %v668 = vmul.f32 %v357, %v667
        %v670 = vrot.slane %v668, 1
        %v672 = vadd.f32 %v665, %v670
        %s673 = sld [smem:[#allocation8 + $0x282]]
        %v674 = vstv %s673
        %v675 = vmul.f32 %v357, %v674
        %v677 = vrot.slane %v675, 2
        %v679 = vadd.f32 %v672, %v677
        %s680 = sld [smem:[#allocation8 + $0x283]]
        %v681 = vstv %s680
        %v682 = vmul.f32 %v357, %v681
        %v684 = vrot.slane %v682, 3
        %v686 = vadd.f32 %v679, %v684
        %s687 = sld [smem:[#allocation8 + $0x284]]
        %v688 = vstv %s687
        %v689 = vmul.f32 %v357, %v688
        %v691 = vrot.slane %v689, 4
        %v693 = vadd.f32 %v686, %v691
        %s694 = sld [smem:[#allocation8 + $0x285]]
        %v695 = vstv %s694
        %v696 = vmul.f32 %v357, %v695
        %v698 = vrot.slane %v696, 5
        %v700 = vadd.f32 %v693, %v698
        %s701 = sld [smem:[#allocation8 + $0x286]]
        %v702 = vstv %s701
        %v703 = vmul.f32 %v357, %v702
        %v705 = vrot.slane %v703, 6
        %v707 = vadd.f32 %v700, %v705
        %s708 = sld [smem:[#allocation8 + $0x287]]
        %v709 = vstv %s708
        %v710 = vmul.f32 %v357, %v709
        %v712 = vrot.slane %v710, 7
        %v714 = vadd.f32 %v707, %v712
        %s715 = sld [smem:[#allocation9 + $0x5]]
        %v716 = vstv %s715
        %v717 = vadd.f32 %v714, %v716
        %v718 = vxor.u32 %v717, 2147483648
        %v719 = vmul.f32 %v718, 1.442695
        %v720 = vpow.pop %v719
        %v721 = vadd.f32 %v720, 1.0
        %v722 = vrcp.pop %v721
        %v723 = vmul.f32 1.0, %v722
        %s724 = sld [smem:[#allocation10]]
        %v725 = vstv %s724
        %v726 = vmul.f32 %v418, %v725
        %s727 = sld [smem:[#allocation10 + $0x1]]
        %v728 = vstv %s727
        %v729 = vmul.f32 %v479, %v728
        %v730 = vadd.f32 %v726, %v729
        %s731 = sld [smem:[#allocation10 + $0x2]]
        %v732 = vstv %s731
        %v733 = vmul.f32 %v540, %v732
        %v734 = vadd.f32 %v730, %v733
        %s735 = sld [smem:[#allocation10 + $0x3]]
        %v736 = vstv %s735
        %v737 = vmul.f32 %v601, %v736
        %v738 = vadd.f32 %v734, %v737
        %s739 = sld [smem:[#allocation10 + $0x4]]
        %v740 = vstv %s739
        %v741 = vmul.f32 %v662, %v740
        %v742 = vadd.f32 %v738, %v741
        %s743 = sld [smem:[#allocation10 + $0x5]]
        %v744 = vstv %s743
        %v745 = vmul.f32 %v723, %v744
        %v746 = vadd.f32 %v742, %v745
        %s747 = sld [smem:[#allocation12]]
        %v748 = vstv %s747
        %v749 = vadd.f32 %v746, %v748
        %v750 = vxor.u32 %v749, 2147483648
        %v751 = vmul.f32 %v750, 1.442695
        %v752 = vpow.pop %v751
        %v753 = vadd.f32 %v752, 1.0
        %v754 = vrcp.pop %v753
        %v755 = vmul.f32 1.0, %v754
        %s756 = sld [smem:[#allocation10 + $0x80]]
        %v757 = vstv %s756
        %v758 = vmul.f32 %v418, %v757
        %s759 = sld [smem:[#allocation10 + $0x81]]
        %v760 = vstv %s759
        %v761 = vmul.f32 %v479, %v760
        %v762 = vadd.f32 %v758, %v761
        %s763 = sld [smem:[#allocation10 + $0x82]]
        %v764 = vstv %s763
        %v765 = vmul.f32 %v540, %v764
        %v766 = vadd.f32 %v762, %v765
        %s767 = sld [smem:[#allocation10 + $0x83]]
        %v768 = vstv %s767
        %v769 = vmul.f32 %v601, %v768
        %v770 = vadd.f32 %v766, %v769
        %s771 = sld [smem:[#allocation10 + $0x84]]
        %v772 = vstv %s771
        %v773 = vmul.f32 %v662, %v772
        %v774 = vadd.f32 %v770, %v773
        %s775 = sld [smem:[#allocation10 + $0x85]]
        %v776 = vstv %s775
        %v777 = vmul.f32 %v723, %v776
        %v778 = vadd.f32 %v774, %v777
        %s779 = sld [smem:[#allocation12 + $0x1]]
        %v780 = vstv %s779
        %v781 = vadd.f32 %v778, %v780
        %v782 = vxor.u32 %v781, 2147483648
        %v783 = vmul.f32 %v782, 1.442695
        %v784 = vpow.pop %v783
        %v785 = vadd.f32 %v784, 1.0
        %v786 = vrcp.pop %v785
        %v787 = vmul.f32 1.0, %v786
        %s788 = sld [smem:[#allocation10 + $0x100]]
        %v789 = vstv %s788
        %v790 = vmul.f32 %v418, %v789
        %s791 = sld [smem:[#allocation10 + $0x101]]
        %v792 = vstv %s791
        %v793 = vmul.f32 %v479, %v792
        %v794 = vadd.f32 %v790, %v793
        %s795 = sld [smem:[#allocation10 + $0x102]]
        %v796 = vstv %s795
        %v797 = vmul.f32 %v540, %v796
        %v798 = vadd.f32 %v794, %v797
        %s799 = sld [smem:[#allocation10 + $0x103]]
        %v800 = vstv %s799
        %v801 = vmul.f32 %v601, %v800
        %v802 = vadd.f32 %v798, %v801
        %s803 = sld [smem:[#allocation10 + $0x104]]
        %v804 = vstv %s803
        %v805 = vmul.f32 %v662, %v804
        %v806 = vadd.f32 %v802, %v805
        %s807 = sld [smem:[#allocation10 + $0x105]]
        %v808 = vstv %s807
        %v809 = vmul.f32 %v723, %v808
        %v810 = vadd.f32 %v806, %v809
        %s811 = sld [smem:[#allocation12 + $0x2]]
        %v812 = vstv %s811
        %v813 = vadd.f32 %v810, %v812
        %v814 = vxor.u32 %v813, 2147483648
        %v815 = vmul.f32 %v814, 1.442695
        %v816 = vpow.pop %v815
        %v817 = vadd.f32 %v816, 1.0
        %v818 = vrcp.pop %v817
        %v819 = vmul.f32 1.0, %v818
        %s820 = sld [smem:[#allocation10 + $0x180]]
        %v821 = vstv %s820
        %v822 = vmul.f32 %v418, %v821
        %s823 = sld [smem:[#allocation10 + $0x181]]
        %v824 = vstv %s823
        %v825 = vmul.f32 %v479, %v824
        %v826 = vadd.f32 %v822, %v825
        %s827 = sld [smem:[#allocation10 + $0x182]]
        %v828 = vstv %s827
        %v829 = vmul.f32 %v540, %v828
        %v830 = vadd.f32 %v826, %v829
        %s831 = sld [smem:[#allocation10 + $0x183]]
        %v832 = vstv %s831
        %v833 = vmul.f32 %v601, %v832
        %v834 = vadd.f32 %v830, %v833
        %s835 = sld [smem:[#allocation10 + $0x184]]
        %v836 = vstv %s835
        %v837 = vmul.f32 %v662, %v836
        %v838 = vadd.f32 %v834, %v837
        %s839 = sld [smem:[#allocation10 + $0x185]]
        %v840 = vstv %s839
        %v841 = vmul.f32 %v723, %v840
        %v842 = vadd.f32 %v838, %v841
        %s843 = sld [smem:[#allocation12 + $0x3]]
        %v844 = vstv %s843
        %v845 = vadd.f32 %v842, %v844
        %v846 = vxor.u32 %v845, 2147483648
        %v847 = vmul.f32 %v846, 1.442695
        %v848 = vpow.pop %v847
        %v849 = vadd.f32 %v848, 1.0
        %v850 = vrcp.pop %v849
        %v851 = vmul.f32 1.0, %v850
        %s852 = sld [smem:[#allocation13]]
        %v853 = vstv %s852
        %v854 = vmul.f32 %v755, %v853
        %s855 = sld [smem:[#allocation13 + $0x1]]
        %v856 = vstv %s855
        %v857 = vmul.f32 %v787, %v856
        %v858 = vadd.f32 %v854, %v857
        %s859 = sld [smem:[#allocation13 + $0x2]]
        %v860 = vstv %s859
        %v861 = vmul.f32 %v819, %v860
        %v862 = vadd.f32 %v858, %v861
        %s863 = sld [smem:[#allocation13 + $0x3]]
        %v864 = vstv %s863
        %v865 = vmul.f32 %v851, %v864
        %v866 = vadd.f32 %v862, %v865
        %s867 = sld [smem:[#allocation2]]
        %v868 = vstv %s867
        %v869 = vadd.f32 %v866, %v868
        %v870 = vxor.u32 %v869, 2147483648
        %v871 = vmul.f32 %v870, 1.442695
        %v872 = vpow.pop %v871
        %v873 = vadd.f32 %v872, 1.0
        %v874 = vrcp.pop %v873
        %v875 = vmul.f32 1.0, %v874
        %876 = vst [vmem:[%s356] sm:$0x1] %v875
        %s877 = sand.u32 %s189, 1
        %s878 = scalar_lea.sflag [#allocation5], %s877
        %s879 = sand.u32 %s189, 1
        %s880 = scalar_lea.vmem [#allocation15], %s879
        // Predicated region
        $region73: #{tpu_custom_call.1} parent=47 // pred_check
          %p881 = pneg %p199
        $region74: #{tpu_custom_call.1} parent=47 // pred_check_branch
          %883 = sbr.rel (%p881) target = $region76
        $region75: #{tpu_custom_call.1} parent=47 // pred_region
          %s885 = ssub.s32 16, 16
          %886 = vsyncadd %s878, %s885
          %s887 = smul.addr %s29, 16
          %s888 = scalar_lea.hbm %s7, %s887
          %s890 = sshll.u32 %s880, 4
          %s891 = int_to_ptr.vmem [resolvable:$true] %s890
          %893 = dma.vmem_to_hbm [thread:$0]  %s891, 16, %s888, %s878
        $region76: #{tpu_custom_call.1} parent=47 // pred_fallthru
          _
      $region48: #{tpu_custom_call.1} parent=5 // pred_fallthru
        _
      %p894 = scmp.le.s32.totalorder 2, %s24
      // Predicated region
      $region77: #{tpu_custom_call.1} parent=5 // pred_check
        %p895 = pneg %p894
      $region78: #{tpu_custom_call.1} parent=5 // pred_check_branch
        %897 = sbr.rel (%p895) target = $region80
      $region79: #{tpu_custom_call.1} parent=5 // pred_region
        %s898 = ssub.s32 %s24, 2
        // Predicated region
        $region81: #{tpu_custom_call.1} parent=79 // pred_check
          %p899 = pneg %p205
        $region82: #{tpu_custom_call.1} parent=79 // pred_check_branch
          %901 = sbr.rel (%p899) target = $region84
        $region83: #{tpu_custom_call.1} parent=79 // pred_region
          %s902 = sand.u32 %s190, 1
          %s903 = scalar_lea.sflag [#allocation5], %s902
          %s904 = sand.u32 %s190, 1
          %s905 = scalar_lea.vmem [#allocation15], %s904
          %906 = dma.done %s903, 16
        $region84: #{tpu_custom_call.1} parent=79 // pred_fallthru
          _
      $region80: #{tpu_custom_call.1} parent=5 // pred_fallthru
        _
    $region6: #{tpu_custom_call.1} parent=1 // loop_footer
      %s28 = sadd.s32 1, %s24
    $region7: #{tpu_custom_call.1} parent=1 // loop_footer_branch
      %23 = sbr.rel target = $region3
    $region8: #{tpu_custom_call.1} parent=1 // loop_exit
      _
    %907 = vsyncpa [#allocation4], 1
    %s908 = scalar_lea.sflag [#allocation4], 1
    %909 = vsyncpa %s908, 1
    %910 = vsyncpa [#allocation5], 1
    %s911 = scalar_lea.sflag [#allocation5], 1
    %912 = vsyncpa %s911, 1
    %913 = vsyncpa [#allocation6], 1
    %s914 = scalar_lea.sflag [#allocation6], 1
    %915 = vsyncpa %s914, 1
    %916 = vsyncpa [#allocation7], 1
    %s917 = scalar_lea.sflag [#allocation7], 1
    %918 = vsyncpa %s917, 1
    %919 = vsyncpa [#allocation11], 1
    %920 = vsyncpa [#allocation14], 1

</llo_original>
